<compile_context>
chip_gen: v7x
topology: tpu7x:2x2x1
jax: 0.10.0
libtpu: 0.0.40
codegen_flags: <defaults>
</compile_context>

<pallas_src>
import math
import functools

import jax
import jax.numpy as jnp
from jax import lax
from jax.experimental import pallas as pl
from jax.experimental.pallas import tpu as pltpu


def _mha_kernel(x_ref, wqkv_ref, bqkv_ref, wo_ref, bo_ref, o_ref, acc_ref,
                *, head_dim):
    hd = head_dim
    h = pl.program_id(1)

    @pl.when(h == 0)
    def _init():
        acc_ref[...] = jnp.zeros_like(acc_ref)

    x = x_ref[...]                                            # (S, D), bf16

    # Fused per-head QKV projection: one (S, D) @ (D, 3*hd) MXU pass, f32 acc.
    # 1/sqrt(hd) is already folded into the Wq / bq columns host-side.
    qkv = jnp.dot(x, wqkv_ref[...],
                  preferred_element_type=jnp.float32) + bqkv_ref[...]   # (S, 3*hd)
    q = qkv[:, 0 * hd:1 * hd].astype(x.dtype)                 # (S, hd)
    k = qkv[:, 1 * hd:2 * hd].astype(x.dtype)                 # (S, hd)
    v = qkv[:, 2 * hd:3 * hd].astype(x.dtype)                 # (S, hd)

    # Scores: contract last dims directly (no explicit transpose / relayout).
    s = lax.dot_general(q, k, (((1,), (1,)), ((), ())),
                        preferred_element_type=jnp.float32)   # (S, S)

    # Numerically stable softmax numerator in f32; normalize AFTER the PV matmul.
    s = s - jnp.max(s, axis=-1, keepdims=True)
    p = jnp.exp(s)
    denom = jnp.sum(p, axis=-1, keepdims=True)                # (S, 1)

    zh = jnp.dot(p.astype(v.dtype), v,
                 preferred_element_type=jnp.float32)          # (S, hd), f32
    zh = zh * pl.reciprocal(denom, approx=True)               # EUP slot, ~free

    # Output projection contribution of this head, accumulated over the head axis.
    acc_ref[...] += jnp.dot(zh.astype(wo_ref.dtype), wo_ref[...],
                            preferred_element_type=jnp.float32)   # (S, D)

    @pl.when(h == pl.num_programs(1) - 1)
    def _finalize():
        o_ref[...] = (acc_ref[...] + bo_ref[...]).astype(o_ref.dtype)


def _vmem_bytes_estimate(S, D, hd, out_itemsize):
    bf16, f32 = 2, 4
    blocks = (2 * S * D * bf16            # x block (double-buffered)
              + 2 * D * 3 * hd * bf16     # per-head fused Wqkv block
              + 2 * 3 * hd * f32          # per-head fused bqkv block
              + 2 * hd * D * bf16         # per-head Wo row block
              + 2 * D * f32               # bo
              + 2 * S * D * out_itemsize  # output block
              + S * D * f32)              # f32 accumulator scratch
    temps = S * 3 * hd * f32 + 2 * S * S * f32 + 2 * S * hd * f32
    return blocks + temps


def multi_head_attention(x, wq, bq, wk, bk, wv, bv, wo, bo, *, num_heads):
    B, S, D = x.shape
    assert D % num_heads == 0
    H = num_heads
    hd = D // H
    compute_dtype = jnp.bfloat16
    scale = 1.0 / math.sqrt(hd)

    def to_heads(w):                       # (D, D) -> (H, D, hd), head-major output cols
        return w.reshape(D, H, hd).transpose(1, 0, 2)

    # Head-major fused QKV weight / bias; scale folded into the Q columns.
    wqkv_heads = jnp.concatenate(
        [to_heads(wq * scale), to_heads(wk), to_heads(wv)], axis=-1
    ).astype(compute_dtype)                                    # (H, D, 3*hd)
    bqkv_heads = jnp.concatenate(
        [(bq * scale).reshape(H, 1, hd), bk.reshape(H, 1, hd), bv.reshape(H, 1, hd)],
        axis=-1).astype(jnp.float32)                           # (H, 1, 3*hd)
    wo_heads = wo.reshape(H, hd, D).astype(compute_dtype)      # (H, hd, D)
    bo_row = bo.reshape(1, D).astype(jnp.float32)              # (1, D)
    x_c = x.astype(compute_dtype)

    kernel = functools.partial(_mha_kernel, head_dim=hd)

    vmem_limit = int(min(64 * 1024 * 1024,
                         max(32 * 1024 * 1024,
                             2 * _vmem_bytes_estimate(S, D, hd, x.dtype.itemsize))))

    return pl.pallas_call(
        kernel,
        out_shape=jax.ShapeDtypeStruct((B, S, D), x.dtype),
        grid_spec=pltpu.PrefetchScalarGridSpec(
            num_scalar_prefetch=0,
            grid=(B, H),                                       # head axis last (reduction)
            in_specs=[
                pl.BlockSpec((None, S, D), lambda b, h: (b, 0, 0)),        # x (resident over h)
                pl.BlockSpec((None, D, 3 * hd), lambda b, h: (h, 0, 0)),   # Wqkv[h]
                pl.BlockSpec((None, 1, 3 * hd), lambda b, h: (h, 0, 0)),   # bqkv[h]
                pl.BlockSpec((None, hd, D), lambda b, h: (h, 0, 0)),       # Wo rows for head h
                pl.BlockSpec((1, D), lambda b, h: (0, 0)),                 # bo
            ],
            out_specs=pl.BlockSpec((None, S, D), lambda b, h: (b, 0, 0)),
            scratch_shapes=[pltpu.VMEM((S, D), jnp.float32)],              # f32 output accumulator
        ),
        compiler_params=pltpu.CompilerParams(
            dimension_semantics=("parallel", "arbitrary"),
            vmem_limit_bytes=vmem_limit),
    )(x_c, wqkv_heads, bqkv_heads, wo_heads, bo_row)


def _reference(x, wq, bq, wk, bk, wv, bv, wo, bo, *, num_heads):
    B, S, D = x.shape
    hd = D // num_heads
    q = x @ wq + bq
    k = x @ wk + bk
    v = x @ wv + bv
    q = q.reshape(B, S, num_heads, hd).transpose(0, 2, 1, 3)
    k = k.reshape(B, S, num_heads, hd).transpose(0, 2, 1, 3)
    v = v.reshape(B, S, num_heads, hd).transpose(0, 2, 1, 3)
    scores = jnp.einsum("bhqd,bhkd->bhqk", q, k) / math.sqrt(hd)
    w = jax.nn.softmax(scores, axis=-1)
    z = jnp.einsum("bhqk,bhkd->bhqd", w, v)
    z = z.transpose(0, 2, 1, 3).reshape(B, S, D)
    return z @ wo + bo


if __name__ == "__main__":
    # Small shapes consistent with the module: batch=2, seq=8, embed_dim=32, heads=4
    B, S, D, H = 2, 8, 32, 4

    key = jax.random.PRNGKey(0)
    keys = jax.random.split(key, 9)
    scale = 1.0 / math.sqrt(D)

    x  = jax.random.normal(keys[0], (B, S, D), dtype=jnp.float32)
    wq = jax.random.uniform(keys[1], (D, D), jnp.float32, -scale, scale)
    bq = jax.random.uniform(keys[2], (D,),   jnp.float32, -scale, scale)
    wk = jax.random.uniform(keys[3], (D, D), jnp.float32, -scale, scale)
    bk = jax.random.uniform(keys[4], (D,),   jnp.float32, -scale, scale)
    wv = jax.random.uniform(keys[5], (D, D), jnp.float32, -scale, scale)
    bv = jax.random.uniform(keys[6], (D,),   jnp.float32, -scale, scale)
    wo = jax.random.uniform(keys[7], (D, D), jnp.float32, -scale, scale)
    bo = jax.random.uniform(keys[8], (D,),   jnp.float32, -scale, scale)

    out = multi_head_attention(x, wq, bq, wk, bk, wv, bv, wo, bo, num_heads=H)
    out = jax.block_until_ready(out)

    ref = _reference(x, wq, bq, wk, bk, wv, bv, wo, bo, num_heads=H)
    assert out.shape == (B, S, D)
    # bf16 MXU inputs + approx reciprocal -> tolerance loosened vs. pure-f32 path.
    max_err = jnp.max(jnp.abs(out - ref))
    assert max_err < 2e-2, f"mismatch vs reference: max abs err {max_err}"

    print("KERNEL_OK")
</pallas_src>

<mosaic_0001>
module attributes {stable_mosaic.version = 11 : i64} {
  func.func @_mha_kernel(%arg0: i32, %arg1: i32, %arg2: memref<1x8x32xbf16, #tpu.memory_space<vmem>>, %arg3: memref<1x32x24xbf16, #tpu.memory_space<vmem>>, %arg4: memref<1x1x24xf32, #tpu.memory_space<vmem>>, %arg5: memref<1x8x32xbf16, #tpu.memory_space<vmem>>, %arg6: memref<1x32xf32, #tpu.memory_space<vmem>>, %arg7: memref<1x8x32xf32, #tpu.memory_space<vmem>>, %arg8: memref<8x32xf32, #tpu.memory_space<vmem>>) attributes {dimension_semantics = [#tpu.dimension_semantics<parallel>, #tpu.dimension_semantics<arbitrary>], iteration_bounds = array<i64: 2, 4>, scalar_prefetch = 0 : i64, scratch_operands = 1 : i64, tpu.core_type = #tpu.core_type<tc>, window_params = [{transform_indices = @transform_0, window_bounds = array<i64: 1, 8, 32>}, {transform_indices = @transform_1, window_bounds = array<i64: 1, 32, 24>}, {transform_indices = @transform_2, window_bounds = array<i64: 1, 1, 24>}, {transform_indices = @transform_3, window_bounds = array<i64: 1, 8, 32>}, {pipeline_mode = #tpu.pipeline_mode<synchronous>, transform_indices = @transform_4, window_bounds = array<i64: 1, 32>}, {transform_indices = @transform_5, window_bounds = array<i64: 1, 8, 32>}]} {
    %c0_i32 = arith.constant 0 : i32
    %0 = arith.cmpi eq, %arg1, %c0_i32 : i32
    %1 = arith.extui %0 : i1 to i32
    %c0_i32_0 = arith.constant 0 : i32
    %2 = arith.cmpi ne, %1, %c0_i32_0 : i32
    scf.if %2 {
      %cst_22 = arith.constant 0.000000e+00 : f32
      %41 = vector.broadcast %cst_22 : f32 to vector<8x32xf32>
      %c0_23 = arith.constant 0 : index
      %c0_24 = arith.constant 0 : index
      %42 = vector.load %arg8[%c0_23, %c0_24] : memref<8x32xf32, #tpu.memory_space<vmem>>, vector<8x32xf32>
      tpu.vector_store %arg8[%c0_23, %c0_24], %41 {strides = array<i32>} : memref<8x32xf32, #tpu.memory_space<vmem>>, vector<8x32xf32>,
    } else {
    }
    %c0 = arith.constant 0 : index
    %c0_1 = arith.constant 0 : index
    %c0_2 = arith.constant 0 : index
    %3 = vector.load %arg2[%c0, %c0_1, %c0_2] : memref<1x8x32xbf16, #tpu.memory_space<vmem>>, vector<1x8x32xbf16>
    %4 = vector.shape_cast %3 : vector<1x8x32xbf16> to vector<8x32xbf16>
    %c0_3 = arith.constant 0 : index
    %c0_4 = arith.constant 0 : index
    %c0_5 = arith.constant 0 : index
    %5 = vector.load %arg3[%c0_3, %c0_4, %c0_5] : memref<1x32x24xbf16, #tpu.memory_space<vmem>>, vector<1x32x24xbf16>
    %6 = vector.shape_cast %5 : vector<1x32x24xbf16> to vector<32x24xbf16>
    %cst = arith.constant dense<0.000000e+00> : vector<8x24xf32>
    %7 = tpu.matmul %4, %6, %cst {dimension_numbers = #tpu.dot_dimension_numbers<[1], [0], [0], [1], [0, 0, 1, 1], [], []>} : vector<8x32xbf16>, vector<32x24xbf16>, vector<8x24xf32> -> vector<8x24xf32>
    %c0_6 = arith.constant 0 : index
    %c0_7 = arith.constant 0 : index
    %c0_8 = arith.constant 0 : index
    %8 = vector.load %arg4[%c0_6, %c0_7, %c0_8] : memref<1x1x24xf32, #tpu.memory_space<vmem>>, vector<1x1x24xf32>
    %9 = vector.shape_cast %8 : vector<1x1x24xf32> to vector<1x24xf32>
    %10 = vector.broadcast %9 : vector<1x24xf32> to vector<8x24xf32>
    %11 = arith.addf %7, %10 : vector<8x24xf32>
    %12 = vector.extract_strided_slice %11 {offsets = [0, 0], sizes = [8, 8], strides = [1, 1]} : vector<8x24xf32> to vector<8x8xf32>
    %13 = arith.truncf %12 : vector<8x8xf32> to vector<8x8xbf16>
    %14 = vector.extract_strided_slice %11 {offsets = [0, 8], sizes = [8, 8], strides = [1, 1]} : vector<8x24xf32> to vector<8x8xf32>
    %15 = arith.truncf %14 : vector<8x8xf32> to vector<8x8xbf16>
    %16 = vector.extract_strided_slice %11 {offsets = [0, 16], sizes = [8, 8], strides = [1, 1]} : vector<8x24xf32> to vector<8x8xf32>
    %17 = arith.truncf %16 : vector<8x8xf32> to vector<8x8xbf16>
    %cst_9 = arith.constant dense<0.000000e+00> : vector<8x8xf32>
    %18 = tpu.matmul %13, %15, %cst_9 {dimension_numbers = #tpu.dot_dimension_numbers<[1], [1], [0], [0], [0, 0, 1, 0], [], []>} : vector<8x8xbf16>, vector<8x8xbf16>, vector<8x8xf32> -> vector<8x8xf32>
    %cst_10 = arith.constant dense<0xFF800000> : vector<8xf32>
    %19 = vector.multi_reduction <maximumf>, %18, %cst_10 [1] : vector<8x8xf32> to vector<8xf32>
    %20 = vector.shape_cast %19 : vector<8xf32> to vector<8x1xf32>
    %21 = vector.broadcast %20 : vector<8x1xf32> to vector<8x8xf32>
    %22 = arith.subf %18, %21 : vector<8x8xf32>
    %23 = math.exp %22 : vector<8x8xf32>
    %cst_11 = arith.constant dense<0.000000e+00> : vector<8xf32>
    %24 = vector.multi_reduction <add>, %23, %cst_11 [1] : vector<8x8xf32> to vector<8xf32>
    %25 = vector.shape_cast %24 : vector<8xf32> to vector<8x1xf32>
    %26 = arith.truncf %23 : vector<8x8xf32> to vector<8x8xbf16>
    %cst_12 = arith.constant dense<0.000000e+00> : vector<8x8xf32>
    %27 = tpu.matmul %26, %17, %cst_12 {dimension_numbers = #tpu.dot_dimension_numbers<[1], [0], [0], [1], [0, 0, 1, 1], [], []>} : vector<8x8xbf16>, vector<8x8xbf16>, vector<8x8xf32> -> vector<8x8xf32>
    %28 = tpu.reciprocal %25 {approx = true} : vector<8x1xf32> -> vector<8x1xf32>
    %29 = vector.broadcast %28 : vector<8x1xf32> to vector<8x8xf32>
    %30 = arith.mulf %27, %29 : vector<8x8xf32>
    %c0_13 = arith.constant 0 : index
    %c0_14 = arith.constant 0 : index
    %31 = vector.load %arg8[%c0_13, %c0_14] : memref<8x32xf32, #tpu.memory_space<vmem>>, vector<8x32xf32>
    %32 = arith.truncf %30 : vector<8x8xf32> to vector<8x8xbf16>
    %c0_15 = arith.constant 0 : index
    %c0_16 = arith.constant 0 : index
    %c0_17 = arith.constant 0 : index
    %33 = vector.load %arg5[%c0_15, %c0_16, %c0_17] : memref<1x8x32xbf16, #tpu.memory_space<vmem>>, vector<1x8x32xbf16>
    %34 = vector.shape_cast %33 : vector<1x8x32xbf16> to vector<8x32xbf16>
    %cst_18 = arith.constant dense<0.000000e+00> : vector<8x32xf32>
    %35 = tpu.matmul %32, %34, %cst_18 {dimension_numbers = #tpu.dot_dimension_numbers<[1], [0], [0], [1], [0, 0, 1, 1], [], []>} : vector<8x8xbf16>, vector<8x32xbf16>, vector<8x32xf32> -> vector<8x32xf32>
    %36 = arith.addf %31, %35 : vector<8x32xf32>
    %c0_19 = arith.constant 0 : index
    %c0_20 = arith.constant 0 : index
    %37 = vector.load %arg8[%c0_19, %c0_20] : memref<8x32xf32, #tpu.memory_space<vmem>>, vector<8x32xf32>
    tpu.vector_store %arg8[%c0_19, %c0_20], %36 {strides = array<i32>} : memref<8x32xf32, #tpu.memory_space<vmem>>, vector<8x32xf32>,
    %c3_i32 = arith.constant 3 : i32
    %38 = arith.cmpi eq, %arg1, %c3_i32 : i32
    %39 = arith.extui %38 : i1 to i32
    %c0_i32_21 = arith.constant 0 : i32
    %40 = arith.cmpi ne, %39, %c0_i32_21 : i32
    scf.if %40 {
      %c0_22 = arith.constant 0 : index
      %c0_23 = arith.constant 0 : index
      %41 = vector.load %arg8[%c0_22, %c0_23] : memref<8x32xf32, #tpu.memory_space<vmem>>, vector<8x32xf32>
      %c0_24 = arith.constant 0 : index
      %c0_25 = arith.constant 0 : index
      %42 = vector.load %arg6[%c0_24, %c0_25] : memref<1x32xf32, #tpu.memory_space<vmem>>, vector<1x32xf32>
      %43 = vector.broadcast %42 : vector<1x32xf32> to vector<8x32xf32>
      %44 = arith.addf %41, %43 : vector<8x32xf32>
      %c0_26 = arith.constant 0 : index
      %c0_27 = arith.constant 0 : index
      %c0_28 = arith.constant 0 : index
      %45 = vector.load %arg7[%c0_26, %c0_27, %c0_28] : memref<1x8x32xf32, #tpu.memory_space<vmem>>, vector<1x8x32xf32>
      %46 = vector.shape_cast %45 : vector<1x8x32xf32> to vector<8x32xf32>
      %47 = vector.shape_cast %44 : vector<8x32xf32> to vector<1x8x32xf32>
      tpu.vector_store %arg7[%c0_26, %c0_27, %c0_28], %47 {strides = array<i32>} : memref<1x8x32xf32, #tpu.memory_space<vmem>>, vector<1x8x32xf32>,
    } else {
    }
    return
  }
  func.func @transform_0(%arg0: i32, %arg1: i32) -> (i32, i32, i32) {
    %c0_i32 = arith.constant 0 : i32
    %c0_i32_0 = arith.constant 0 : i32
    %c0_i32_1 = arith.constant 0 : i32
    return %arg0, %c0_i32, %c0_i32_0 : i32, i32, i32
  }
  func.func @transform_1(%arg0: i32, %arg1: i32) -> (i32, i32, i32) {
    %c0_i32 = arith.constant 0 : i32
    %c0_i32_0 = arith.constant 0 : i32
    %c0_i32_1 = arith.constant 0 : i32
    return %arg1, %c0_i32, %c0_i32_0 : i32, i32, i32
  }
  func.func @transform_2(%arg0: i32, %arg1: i32) -> (i32, i32, i32) {
    %c0_i32 = arith.constant 0 : i32
    %c0_i32_0 = arith.constant 0 : i32
    %c0_i32_1 = arith.constant 0 : i32
    return %arg1, %c0_i32, %c0_i32_0 : i32, i32, i32
  }
  func.func @transform_3(%arg0: i32, %arg1: i32) -> (i32, i32, i32) {
    %c0_i32 = arith.constant 0 : i32
    %c0_i32_0 = arith.constant 0 : i32
    %c0_i32_1 = arith.constant 0 : i32
    return %arg1, %c0_i32, %c0_i32_0 : i32, i32, i32
  }
  func.func @transform_4(%arg0: i32, %arg1: i32) -> (i32, i32) {
    %c0_i32 = arith.constant 0 : i32
    %c0_i32_0 = arith.constant 0 : i32
    %c0_i32_1 = arith.constant 0 : i32
    return %c0_i32, %c0_i32_0 : i32, i32
  }
  func.func @transform_5(%arg0: i32, %arg1: i32) -> (i32, i32, i32) {
    %c0_i32 = arith.constant 0 : i32
    %c0_i32_0 = arith.constant 0 : i32
    %c0_i32_1 = arith.constant 0 : i32
    return %arg0, %c0_i32, %c0_i32_0 : i32, i32, i32
  }
}

</mosaic_0001>

<llo_original>
// kernel: tpu_custom_call.1
$region0: #{tpu_custom_call.1}
  #allocation0 [shape = 'u32[]', space=smem, size = 0x4, offset = 0x4, fixed_abs, tag = 'smem constant byte address 0x4 - core index']
  #allocation1 [shape = 'u32[144,128]{1,0:T(1,128)}', space=vmem, size = 0x12000, scoped, tag = 'internal scratch']
  #allocation2 [shape = 'f32[8,32]{1,0:T(8,128)}', space=vmem, size = 0x1000, scoped, tag = 'scratch operand']
  %s0 = inlined_call_operand.vmem [shape: bf16[2,8,32], index: 0, kind: input, shape index: {}]
  %s1 = inlined_call_operand.vmem [shape: bf16[4,32,24], index: 1, kind: input, shape index: {}]
  %s2 = inlined_call_operand.vmem [shape: f32[4,1,24], index: 2, kind: input, shape index: {}]
  %s3 = inlined_call_operand.vmem [shape: bf16[4,8,32], index: 3, kind: input, shape index: {}]
  %s4 = inlined_call_operand.vmem [shape: f32[1,32], index: 4, kind: input, shape index: {}]
  %s5 = inlined_call_operand.hbm [shape: f32[2,8,32], index: 5, kind: output, shape index: {}]
  %s6 = sld [smem:[#allocation0]]
  $region61: #{tpu_custom_call.1} parent=0
    _
  %s8 = ssub.s32 1, %s6
  %s9 = scalar_select 0, %s8, %s6
  $region1: #{tpu_custom_call.1} parent=0
    #allocation3 [shape = 'u8[8192]{0}', space=vmem, size = 0x2000, scoped, tag = 'output window, operand 0']
    #allocation4 [shape = 's32[2]{0}', space=sflag, size = 0x8, scoped, tag = 'scoped memory for tpu_custom_call.1']
    %10 = vsyncpa [#allocation4], 0
    %s11 = scalar_lea.sflag [#allocation4], 1
    %12 = vsyncpa %s11, 0
    loop: start=0, step=1, limit=10
    $region2: #{tpu_custom_call.1} parent=1 // loop_pre_header
      _
    $region3: #{tpu_custom_call.1} parent=1 // loop_header
      %s14 = sphi 0, %s18
      %p15 = scmp.ge.s32.totalorder %s14, 10
      %s21 = sphi 0, %s33
      %s22 = sphi 0, %s29
      %s23 = sphi 0, %s21
      %s24 = sphi 0, %s22
      %s25 = sphi 0, %s23
      %s26 = sphi 0, %s24
      %s36 = sphi 0, %s38
      %s39 = sphi 0, %s36
      %s40 = sphi 0, %s39
      %s56 = sphi 0, %s40
      %s62 = sphi 0, %s64
      %s65 = sphi 0, %s62
      %s66 = sphi 0, %s65
      %s82 = sphi 0, %s66
      %s88 = sphi 0, %s90
      %s91 = sphi 0, %s88
      %s92 = sphi 0, %s91
      %s108 = sphi 0, %s92
      %s114 = sphi 0, %s116
      %s117 = sphi 0, %s114
      %s118 = sphi 0, %s117
      %s134 = sphi 0, %s118
      %s138 = sphi 0, %s138
      %s140 = sphi 0, %s138
      %s141 = sphi 0, %s140
      %s155 = sphi 0, %s141
      %s161 = sphi 0, %s163
      %s164 = sphi 0, %s161
      %s165 = sphi 0, %s164
      %s181 = sphi 0, %s165
    $region4: #{tpu_custom_call.1} parent=1 // loop_header_branch
      %17 = sbr.rel (%p15) target = $region8
    $region5: #{tpu_custom_call.1} parent=1 // loop_body
      %s19 = ssub.s32 %s14, 1
      %s20 = ssub.s32 %s14, 2
      %s27 = sadd.s32 1, %s22
      %p28 = scmp.ge.s32.totalorder %s27, 4
      %s29 = scalar_select %p28, 0, %s27
      %s30 = sadd.s32 1, %s21
      %s31 = scalar_select %p28, %s30, %s21
      %p32 = scmp.ge.s32.totalorder %s31, 2
      %s33 = scalar_select %p32, 0, %s31
      %s34 = ssub.s32 %s21, %s33
      %p35 = scmp.eq.s32.totalorder %s34, 0
      %s37 = sadd.s32 %s36, 1
      %s38 = scalar_select %p35, %s36, %s37
      %p41 = pneg %p35
      %p42 = scmp.eq.s32.totalorder %s14, 7
      %p43 = por %p41, %p42
      %p44 = scmp.ne.s32.totalorder %s36, %s39
      %p45 = scmp.eq.s32.totalorder %s14, 0
      %p46 = por %p44, %p45
      %p47 = scmp.ne.s32.totalorder %s36, %s39
      %p48 = scmp.eq.s32.totalorder %s19, 7
      %p49 = por %p47, %p48
      %p50 = scmp.ne.s32.totalorder %s39, %s40
      %p51 = scmp.eq.s32.totalorder %s19, 0
      %p52 = por %p50, %p51
      %p53 = scmp.ne.s32.totalorder %s39, %s40
      %p54 = scmp.eq.s32.totalorder %s20, 7
      %p55 = por %p53, %p54
      %p57 = scmp.ne.s32.totalorder %s40, %s56
      %p58 = scmp.eq.s32.totalorder %s20, 0
      %p59 = por %p57, %p58
      %s60 = ssub.s32 %s22, %s29
      %p61 = scmp.eq.s32.totalorder %s60, 0
      %s63 = sadd.s32 %s62, 1
      %s64 = scalar_select %p61, %s62, %s63
      %p67 = pneg %p61
      %p68 = scmp.eq.s32.totalorder %s14, 7
      %p69 = por %p67, %p68
      %p70 = scmp.ne.s32.totalorder %s62, %s65
      %p71 = scmp.eq.s32.totalorder %s14, 0
      %p72 = por %p70, %p71
      %p73 = scmp.ne.s32.totalorder %s62, %s65
      %p74 = scmp.eq.s32.totalorder %s19, 7
      %p75 = por %p73, %p74
      %p76 = scmp.ne.s32.totalorder %s65, %s66
      %p77 = scmp.eq.s32.totalorder %s19, 0
      %p78 = por %p76, %p77
      %p79 = scmp.ne.s32.totalorder %s65, %s66
      %p80 = scmp.eq.s32.totalorder %s20, 7
      %p81 = por %p79, %p80
      %p83 = scmp.ne.s32.totalorder %s66, %s82
      %p84 = scmp.eq.s32.totalorder %s20, 0
      %p85 = por %p83, %p84
      %s86 = ssub.s32 %s22, %s29
      %p87 = scmp.eq.s32.totalorder %s86, 0
      %s89 = sadd.s32 %s88, 1
      %s90 = scalar_select %p87, %s88, %s89
      %p93 = pneg %p87
      %p94 = scmp.eq.s32.totalorder %s14, 7
      %p95 = por %p93, %p94
      %p96 = scmp.ne.s32.totalorder %s88, %s91
      %p97 = scmp.eq.s32.totalorder %s14, 0
      %p98 = por %p96, %p97
      %p99 = scmp.ne.s32.totalorder %s88, %s91
      %p100 = scmp.eq.s32.totalorder %s19, 7
      %p101 = por %p99, %p100
      %p102 = scmp.ne.s32.totalorder %s91, %s92
      %p103 = scmp.eq.s32.totalorder %s19, 0
      %p104 = por %p102, %p103
      %p105 = scmp.ne.s32.totalorder %s91, %s92
      %p106 = scmp.eq.s32.totalorder %s20, 7
      %p107 = por %p105, %p106
      %p109 = scmp.ne.s32.totalorder %s92, %s108
      %p110 = scmp.eq.s32.totalorder %s20, 0
      %p111 = por %p109, %p110
      %s112 = ssub.s32 %s22, %s29
      %p113 = scmp.eq.s32.totalorder %s112, 0
      %s115 = sadd.s32 %s114, 1
      %s116 = scalar_select %p113, %s114, %s115
      %p119 = pneg %p113
      %p120 = scmp.eq.s32.totalorder %s14, 7
      %p121 = por %p119, %p120
      %p122 = scmp.ne.s32.totalorder %s114, %s117
      %p123 = scmp.eq.s32.totalorder %s14, 0
      %p124 = por %p122, %p123
      %p125 = scmp.ne.s32.totalorder %s114, %s117
      %p126 = scmp.eq.s32.totalorder %s19, 7
      %p127 = por %p125, %p126
      %p128 = scmp.ne.s32.totalorder %s117, %s118
      %p129 = scmp.eq.s32.totalorder %s19, 0
      %p130 = por %p128, %p129
      %p131 = scmp.ne.s32.totalorder %s117, %s118
      %p132 = scmp.eq.s32.totalorder %s20, 7
      %p133 = por %p131, %p132
      %p135 = scmp.ne.s32.totalorder %s118, %s134
      %p136 = scmp.eq.s32.totalorder %s20, 0
      %p137 = por %p135, %p136
      %s139 = sadd.s32 %s138, 1
      %p142 = scmp.eq.s32.totalorder %s14, 7
      %p143 = scmp.ne.s32.totalorder %s138, %s140
      %p144 = scmp.eq.s32.totalorder %s14, 0
      %p145 = por %p143, %p144
      %p146 = scmp.ne.s32.totalorder %s138, %s140
      %p147 = scmp.eq.s32.totalorder %s19, 7
      %p148 = por %p146, %p147
      %p149 = scmp.ne.s32.totalorder %s140, %s141
      %p150 = scmp.eq.s32.totalorder %s19, 0
      %p151 = por %p149, %p150
      %p152 = scmp.ne.s32.totalorder %s140, %s141
      %p153 = scmp.eq.s32.totalorder %s20, 7
      %p154 = por %p152, %p153
      %p156 = scmp.ne.s32.totalorder %s141, %s155
      %p157 = scmp.eq.s32.totalorder %s20, 0
      %p158 = por %p156, %p157
      %s159 = ssub.s32 %s21, %s33
      %p160 = scmp.eq.s32.totalorder %s159, 0
      %s162 = sadd.s32 %s161, 1
      %s163 = scalar_select %p160, %s161, %s162
      %p166 = pneg %p160
      %p167 = scmp.eq.s32.totalorder %s14, 7
      %p168 = por %p166, %p167
      %p169 = scmp.ne.s32.totalorder %s161, %s164
      %p170 = scmp.eq.s32.totalorder %s14, 0
      %p171 = por %p169, %p170
      %p172 = scmp.ne.s32.totalorder %s161, %s164
      %p173 = scmp.eq.s32.totalorder %s19, 7
      %p174 = por %p172, %p173
      %p175 = scmp.ne.s32.totalorder %s164, %s165
      %p176 = scmp.eq.s32.totalorder %s19, 0
      %p177 = por %p175, %p176
      %p178 = scmp.ne.s32.totalorder %s164, %s165
      %p179 = scmp.eq.s32.totalorder %s20, 7
      %p180 = por %p178, %p179
      %p182 = scmp.ne.s32.totalorder %s165, %s181
      %p183 = scmp.eq.s32.totalorder %s20, 0
      %p184 = por %p182, %p183
      %p185 = scmp.le.s32.totalorder 1, %s14
      %p186 = scmp.lt.s32.totalorder %s14, 9
      %p187 = pnand %p185, %p186
      %p188 = pneg %p187
      // Predicated region
      $region9: #{tpu_custom_call.1} parent=5 // pred_check
        _
      $region10: #{tpu_custom_call.1} parent=5 // pred_check_branch
        %190 = sbr.rel (%p187) target = $region12
      $region11: #{tpu_custom_call.1} parent=5 // pred_region
        %s191 = ssub.s32 %s14, 1
        // Predicated region
        $region13: #{tpu_custom_call.1} parent=11 // pred_check
          %p192 = pneg %p151
        $region14: #{tpu_custom_call.1} parent=11 // pred_check_branch
          %194 = sbr.rel (%p192) target = $region16
        $region15: #{tpu_custom_call.1} parent=11 // pred_region
          _
        $region16: #{tpu_custom_call.1} parent=11 // pred_fallthru
          _
      $region12: #{tpu_custom_call.1} parent=5 // pred_fallthru
        _
      %p195 = scmp.lt.s32.totalorder %s14, 8
      // Predicated region
      $region17: #{tpu_custom_call.1} parent=5 // pred_check
        %p196 = pneg %p195
      $region18: #{tpu_custom_call.1} parent=5 // pred_check_branch
        %198 = sbr.rel (%p196) target = $region20
      $region19: #{tpu_custom_call.1} parent=5 // pred_region
        // Predicated region
        $region21: #{tpu_custom_call.1} parent=19 // pred_check
          %p199 = pneg %p46
        $region22: #{tpu_custom_call.1} parent=19 // pred_check_branch
          %201 = sbr.rel (%p199) target = $region24
        $region23: #{tpu_custom_call.1} parent=19 // pred_region
          %p202 = scmp.lt.s32.totalorder %s21, 1
          %s203 = scalar_select %p202, %s21, 1
          %s204 = smul.addr %s203, 4
          %s205 = scalar_lea.vmem %s0, %s204
        $region24: #{tpu_custom_call.1} parent=19 // pred_fallthru
          _
        // Predicated region
        $region25: #{tpu_custom_call.1} parent=19 // pred_check
          %p206 = pneg %p72
        $region26: #{tpu_custom_call.1} parent=19 // pred_check_branch
          %208 = sbr.rel (%p206) target = $region28
        $region27: #{tpu_custom_call.1} parent=19 // pred_region
          %p209 = scmp.lt.s32.totalorder %s22, 3
          %s210 = scalar_select %p209, %s22, 3
          %s211 = smul.addr %s210, 4
          %s212 = smul.addr %s211, 4
          %s213 = scalar_lea.vmem %s1, %s212
        $region28: #{tpu_custom_call.1} parent=19 // pred_fallthru
          _
        // Predicated region
        $region29: #{tpu_custom_call.1} parent=19 // pred_check
          %p214 = pneg %p98
        $region30: #{tpu_custom_call.1} parent=19 // pred_check_branch
          %216 = sbr.rel (%p214) target = $region32
        $region31: #{tpu_custom_call.1} parent=19 // pred_region
          %p217 = scmp.lt.s32.totalorder %s22, 3
          %s218 = scalar_select %p217, %s22, 3
          %s219 = scalar_lea.vmem %s2, %s218
        $region32: #{tpu_custom_call.1} parent=19 // pred_fallthru
          _
        // Predicated region
        $region33: #{tpu_custom_call.1} parent=19 // pred_check
          %p220 = pneg %p124
        $region34: #{tpu_custom_call.1} parent=19 // pred_check_branch
          %222 = sbr.rel (%p220) target = $region36
        $region35: #{tpu_custom_call.1} parent=19 // pred_region
          %p223 = scmp.lt.s32.totalorder %s22, 3
          %s224 = scalar_select %p223, %s22, 3
          %s225 = smul.addr %s224, 4
          %s226 = scalar_lea.vmem %s3, %s225
        $region36: #{tpu_custom_call.1} parent=19 // pred_fallthru
          _
      $region20: #{tpu_custom_call.1} parent=5 // pred_fallthru
        _
      %p227 = scmp.le.s32.totalorder 1, %s14
      %p228 = scmp.lt.s32.totalorder %s14, 9
      %p229 = pnand %p227, %p228
      %p230 = pneg %p229
      // Predicated region
      $region37: #{tpu_custom_call.1} parent=5 // pred_check
        _
      $region38: #{tpu_custom_call.1} parent=5 // pred_check_branch
        %232 = sbr.rel (%p229) target = $region40
      $region39: #{tpu_custom_call.1} parent=5 // pred_region
        %s233 = ssub.s32 %s14, 1
        %p234 = scmp.lt.s32.totalorder %s23, 1
        %s235 = scalar_select %p234, %s23, 1
        %s236 = smul.addr %s235, 4
        %s237 = scalar_lea.vmem %s0, %s236
        %p238 = pneg %p52
        %p239 = pneg %p49
        %p240 = scmp.lt.s32.totalorder %s24, 3
        %s241 = scalar_select %p240, %s24, 3
        %s242 = smul.addr %s241, 4
        %s243 = smul.addr %s242, 4
        %s244 = scalar_lea.vmem %s1, %s243
        %p245 = pneg %p78
        %p246 = pneg %p75
        %p247 = scmp.lt.s32.totalorder %s24, 3
        %s248 = scalar_select %p247, %s24, 3
        %s249 = scalar_lea.vmem %s2, %s248
        %p250 = pneg %p104
        %p251 = pneg %p101
        %p252 = scmp.lt.s32.totalorder %s24, 3
        %s253 = scalar_select %p252, %s24, 3
        %s254 = smul.addr %s253, 4
        %s255 = scalar_lea.vmem %s3, %s254
        %p256 = pneg %p130
        %p257 = pneg %p127
        %p258 = pneg %p151
        %p259 = pneg %p148
        %p260 = pneg %p177
        %p261 = pneg %p174
        %s262 = sand.u32 %s164, 1
        %s263 = scalar_lea.sflag [#allocation4], %s262
        %s264 = sand.u32 %s164, 1
        %s265 = smul.addr %s264, 8
        %s266 = scalar_lea.vmem [#allocation3], %s265
        %p267 = scmp.lt.s32.totalorder %s23, 1
        %s268 = scalar_select %p267, %s23, 1
        %s269 = smul.addr %s268, 4
        %s270 = scalar_lea.vmem %s0, %s269
        %p271 = scmp.lt.s32.totalorder %s24, 3
        %s272 = scalar_select %p271, %s24, 3
        %s273 = smul.addr %s272, 4
        %s274 = smul.addr %s273, 4
        %s275 = scalar_lea.vmem %s1, %s274
        %p276 = scmp.lt.s32.totalorder %s24, 3
        %s277 = scalar_select %p276, %s24, 3
        %s278 = scalar_lea.vmem %s2, %s277
        %p279 = scmp.lt.s32.totalorder %s24, 3
        %s280 = scalar_select %p279, %s24, 3
        %s281 = smul.addr %s280, 4
        %s282 = scalar_lea.vmem %s3, %s281
        %p284 = scmp.eq.s32.totalorder %s24, 0
        // Predicated region
        $region41: #{tpu_custom_call.1} parent=39 // pred_check
          %p285 = pneg %p284
        $region42: #{tpu_custom_call.1} parent=39 // pred_check_branch
          %287 = sbr.rel (%p285) target = $region44
        $region43: #{tpu_custom_call.1} parent=39 // pred_region
          %vm288 = vcmask 261120
          %289 = vst.msk [vmem:[#allocation2] sm:$0xff] %vm288, 0.0
        $region44: #{tpu_custom_call.1} parent=39 // pred_fallthru
          _
        %v290 = vld [vmem:[%s270] sm:$0xf]
        %v291 = vld [vmem:[%s275] sm:$0xf]
        %v292 = vld [vmem:[%s275 + $0x4] sm:$0xf]
        %v293 = vld [vmem:[%s275 + $0x8] sm:$0xf]
        %v294 = vld [vmem:[%s275 + $0xc] sm:$0xf]
        %v295 = vld [vmem:[%s278] sm:$0x1]
        %v297 = vlaneseq
        %v298 = vshrl.u32 %v297, 7
        %v299 = vsub.s32 0, %v298
        %v300 = vrot.slane %v295, %v299
        %v306 = vunpack.c.l.b16 %v291
        %v307 = vunpack.c.l.b16 %v292
        %v308 = vunpack.c.l.b16 %v293
        %v309 = vunpack.c.l.b16 %v294
        %v310 = vpack.c.b16 %v307, %v306
        %v311 = vpack.c.b16 %v309, %v308
        %vm314 = vcmask 261120
        %v316 = vsel %vm314, %v290, 0
        %318 = vmatprep.subr.bf16.mxu0 0
        %319 = vmatpush1.bf16.msra.mxu0 %v310
        %320 = vmatprep.subr.bf16.mxu0 0
        %321 = vmatpush1.bf16.msra.mxu0 %v311
        %322 = vmatprep.subr.bf16.mxu0 0
        %323 = vmatpush1.bf16.msra.mxu0 0
        %324 = vmatprep.subr.bf16.mxu0 0
        %325 = vmatpush1.bf16.msra.mxu0 0
        %326 = vmatprep.subr.bf16.mxu0 0
        %327 = vmatpush1.bf16.msra.mxu0 0
        %328 = vmatprep.subr.bf16.mxu0 0
        %329 = vmatpush1.bf16.msra.mxu0 0
        %330 = vmatprep.subr.bf16.mxu0 0
        %331 = vmatpush1.bf16.msra.mxu0 0
        %332 = vmatprep.subr.bf16.mxu0 0
        %333 = vmatpush1.bf16.msra.mxu0 0
        %334 = vmatprep.subr.bf16.mxu0 0
        %335 = vmatpush1.bf16.msra.mxu0 0
        %336 = vmatprep.subr.bf16.mxu0 0
        %337 = vmatpush1.bf16.msra.mxu0 0
        %338 = vmatprep.subr.bf16.mxu0 0
        %339 = vmatpush1.bf16.msra.mxu0 0
        %340 = vmatprep.subr.bf16.mxu0 0
        %341 = vmatpush1.bf16.msra.mxu0 0
        %342 = vmatprep.subr.bf16.mxu0 0
        %343 = vmatpush1.bf16.msra.mxu0 0
        %344 = vmatprep.subr.bf16.mxu0 0
        %345 = vmatpush1.bf16.msra.mxu0 0
        %346 = vmatprep.subr.bf16.mxu0 0
        %347 = vmatpush1.bf16.msra.mxu0 0
        %348 = vmatprep.subr.bf16.mxu0 0
        %349 = vmatpush1.bf16.msra.mxu0 0
        %350 = vmatprep.mubr.bf16.mxu0 0
        %351 = vmatmul.mubr.bf16.gmra.mrb[0].mxu0 %v316
        %v352 = vpop.f32.mrb[0].mxu0
        %v353 = vadd.f32 %v300, %v352
        %v354 = vpop.f32.mrb[0].mxu0
        %v355 = vpop.f32.mrb[0].mxu0
        %v356 = vpop.f32.mrb[0].mxu0
        %357 = vdwg.mxu0
        %v358 = vpack.c.bf16 %v353, %v353
        %360 = vrot.lane.b32.xlu0 %v358, 120
        %v361 = vpop.permute.xlu0 %360
        %vm362 = vcmask 64512
        %v364 = vsel %vm362, %v358, 0
        %v367 = vsel %vm362, %v361, 0
        %369 = vmatprep.subr.bf16.mxu0 0
        %370 = vmatpush1.bf16.xpose.msra.mxu0 %v367
        %371 = vmatprep.subr.bf16.mxu0 0
        %372 = vmatpush1.bf16.xpose.msra.mxu0 0
        %373 = vmatprep.subr.bf16.mxu0 0
        %374 = vmatpush1.bf16.xpose.msra.mxu0 0
        %375 = vmatprep.subr.bf16.mxu0 0
        %376 = vmatpush1.bf16.xpose.msra.mxu0 0
        %377 = vmatprep.subr.bf16.mxu0 0
        %378 = vmatpush1.bf16.xpose.msra.mxu0 0
        %379 = vmatprep.subr.bf16.mxu0 0
        %380 = vmatpush1.bf16.xpose.msra.mxu0 0
        %381 = vmatprep.subr.bf16.mxu0 0
        %382 = vmatpush1.bf16.xpose.msra.mxu0 0
        %383 = vmatprep.subr.bf16.mxu0 0
        %384 = vmatpush1.bf16.xpose.msra.mxu0 0
        %385 = vmatprep.subr.bf16.mxu0 0
        %386 = vmatpush1.bf16.xpose.msra.mxu0 0
        %387 = vmatprep.subr.bf16.mxu0 0
        %388 = vmatpush1.bf16.xpose.msra.mxu0 0
        %389 = vmatprep.subr.bf16.mxu0 0
        %390 = vmatpush1.bf16.xpose.msra.mxu0 0
        %391 = vmatprep.subr.bf16.mxu0 0
        %392 = vmatpush1.bf16.xpose.msra.mxu0 0
        %393 = vmatprep.subr.bf16.mxu0 0
        %394 = vmatpush1.bf16.xpose.msra.mxu0 0
        %395 = vmatprep.subr.bf16.mxu0 0
        %396 = vmatpush1.bf16.xpose.msra.mxu0 0
        %397 = vmatprep.subr.bf16.mxu0 0
        %398 = vmatpush1.bf16.xpose.msra.mxu0 0
        %399 = vmatprep.subr.bf16.mxu0 0
        %400 = vmatpush1.bf16.xpose.msra.mxu0 0
        %401 = vmatprep.mubr.bf16.mxu0 0
        %402 = vmatmul.mubr.bf16.gmra.mrb[0].mxu0 %v364
        %v403 = vpop.f32.mrb[0].mxu0
        %v404 = vadd.f32 0.0, %v403
        %v405 = vpop.f32.mrb[0].mxu0
        %v406 = vpop.f32.mrb[0].mxu0
        %v407 = vpop.f32.mrb[0].mxu0
        %408 = vdwg.mxu0
        %v409 = vsel %vm362, %v404, -inf
        %410 = vmax.xlane.f32.xlu0 %v409
        %v411 = vpop.xlane.xlu0 %410
        %v412 = vsub.f32 %v404, %v411
        %v413 = vmul.f32 %v412, 1.442695
        %v414 = vpow.pop %v413
        %v415 = vsel %vm362, %v414, 0.0
        %416 = vadd.xlane.f32.xlu0 %v415
        %v417 = vpop.xlane.xlu0 %416
        %v418 = vpack.c.bf16 %v414, %v414
        %419 = vrot.lane.b32.xlu0 %v358, 112
        %v420 = vpop.permute.xlu0 %419
        %v422 = vsel %vm362, %v418, 0
        %vm424 = vcmask 1043456
        %v426 = vsel %vm424, %v420, 0
        %428 = vmatprep.subr.bf16.mxu0 0
        %429 = vmatpush1.bf16.msra.mxu0 %v426
        %430 = vmatprep.subr.bf16.mxu0 0
        %431 = vmatpush1.bf16.msra.mxu0 0
        %432 = vmatprep.subr.bf16.mxu0 0
        %433 = vmatpush1.bf16.msra.mxu0 0
        %434 = vmatprep.subr.bf16.mxu0 0
        %435 = vmatpush1.bf16.msra.mxu0 0
        %436 = vmatprep.subr.bf16.mxu0 0
        %437 = vmatpush1.bf16.msra.mxu0 0
        %438 = vmatprep.subr.bf16.mxu0 0
        %439 = vmatpush1.bf16.msra.mxu0 0
        %440 = vmatprep.subr.bf16.mxu0 0
        %441 = vmatpush1.bf16.msra.mxu0 0
        %442 = vmatprep.subr.bf16.mxu0 0
        %443 = vmatpush1.bf16.msra.mxu0 0
        %444 = vmatprep.subr.bf16.mxu0 0
        %445 = vmatpush1.bf16.msra.mxu0 0
        %446 = vmatprep.subr.bf16.mxu0 0
        %447 = vmatpush1.bf16.msra.mxu0 0
        %448 = vmatprep.subr.bf16.mxu0 0
        %449 = vmatpush1.bf16.msra.mxu0 0
        %450 = vmatprep.subr.bf16.mxu0 0
        %451 = vmatpush1.bf16.msra.mxu0 0
        %452 = vmatprep.subr.bf16.mxu0 0
        %453 = vmatpush1.bf16.msra.mxu0 0
        %454 = vmatprep.subr.bf16.mxu0 0
        %455 = vmatpush1.bf16.msra.mxu0 0
        %456 = vmatprep.subr.bf16.mxu0 0
        %457 = vmatpush1.bf16.msra.mxu0 0
        %458 = vmatprep.subr.bf16.mxu0 0
        %459 = vmatpush1.bf16.msra.mxu0 0
        %460 = vmatprep.mubr.bf16.mxu0 0
        %461 = vmatmul.mubr.bf16.gmra.mrb[0].mxu0 %v422
        %v462 = vpop.f32.mrb[0].mxu0
        %v463 = vadd.f32 0.0, %v462
        %v464 = vpop.f32.mrb[0].mxu0
        %v465 = vpop.f32.mrb[0].mxu0
        %v466 = vpop.f32.mrb[0].mxu0
        %467 = vdwg.mxu0
        %v468 = vrcp.pop %v417
        %v469 = vmul.f32 %v463, %v468
        %v470 = vld [vmem:[#allocation2] sm:$0xff]
        %v471 = vpack.c.bf16 %v469, %v469
        %v472 = vld [vmem:[%s282] sm:$0xf]
        %v474 = vsel %vm362, %v471, 0
        %v477 = vsel %vm424, %v472, 0
        %479 = vmatprep.subr.bf16.mxu0 0
        %480 = vmatpush1.bf16.msra.mxu0 %v477
        %481 = vmatprep.subr.bf16.mxu0 0
        %482 = vmatpush1.bf16.msra.mxu0 0
        %483 = vmatprep.subr.bf16.mxu0 0
        %484 = vmatpush1.bf16.msra.mxu0 0
        %485 = vmatprep.subr.bf16.mxu0 0
        %486 = vmatpush1.bf16.msra.mxu0 0
        %487 = vmatprep.subr.bf16.mxu0 0
        %488 = vmatpush1.bf16.msra.mxu0 0
        %489 = vmatprep.subr.bf16.mxu0 0
        %490 = vmatpush1.bf16.msra.mxu0 0
        %491 = vmatprep.subr.bf16.mxu0 0
        %492 = vmatpush1.bf16.msra.mxu0 0
        %493 = vmatprep.subr.bf16.mxu0 0
        %494 = vmatpush1.bf16.msra.mxu0 0
        %495 = vmatprep.subr.bf16.mxu0 0
        %496 = vmatpush1.bf16.msra.mxu0 0
        %497 = vmatprep.subr.bf16.mxu0 0
        %498 = vmatpush1.bf16.msra.mxu0 0
        %499 = vmatprep.subr.bf16.mxu0 0
        %500 = vmatpush1.bf16.msra.mxu0 0
        %501 = vmatprep.subr.bf16.mxu0 0
        %502 = vmatpush1.bf16.msra.mxu0 0
        %503 = vmatprep.subr.bf16.mxu0 0
        %504 = vmatpush1.bf16.msra.mxu0 0
        %505 = vmatprep.subr.bf16.mxu0 0
        %506 = vmatpush1.bf16.msra.mxu0 0
        %507 = vmatprep.subr.bf16.mxu0 0
        %508 = vmatpush1.bf16.msra.mxu0 0
        %509 = vmatprep.subr.bf16.mxu0 0
        %510 = vmatpush1.bf16.msra.mxu0 0
        %511 = vmatprep.mubr.bf16.mxu0 0
        %512 = vmatmul.mubr.bf16.gmra.mrb[0].mxu0 %v474
        %v513 = vpop.f32.mrb[0].mxu0
        %v514 = vadd.f32 0.0, %v513
        %v515 = vpop.f32.mrb[0].mxu0
        %v516 = vpop.f32.mrb[0].mxu0
        %v517 = vpop.f32.mrb[0].mxu0
        %518 = vdwg.mxu0
        %v519 = vadd.f32 %v470, %v514
        %520 = vst.msk [vmem:[#allocation2] sm:$0xff] %vm314, %v519
        %p521 = scmp.eq.s32.totalorder %s24, 3
        // Predicated region
        $region45: #{tpu_custom_call.1} parent=39 // pred_check
          %p522 = pneg %p521
        $region46: #{tpu_custom_call.1} parent=39 // pred_check_branch
          %524 = sbr.rel (%p522) target = $region48
        $region47: #{tpu_custom_call.1} parent=39 // pred_region
          %v525 = vld [vmem:[#allocation2] sm:$0xff]
          %v526 = vld [vmem:[%s4] sm:$0x1]
          %v528 = vlaneseq
          %v529 = vshrl.u32 %v528, 7
          %v530 = vsub.s32 0, %v529
          %v531 = vrot.slane %v526, %v530
          %v533 = vadd.f32 %v525, %v531
          %534 = vst.msk [vmem:[%s266] sm:$0xff] %vm314, %v533
        $region48: #{tpu_custom_call.1} parent=39 // pred_fallthru
          _
        %s535 = sand.u32 %s164, 1
        %s536 = scalar_lea.sflag [#allocation4], %s535
        %s537 = sand.u32 %s164, 1
        %s538 = smul.addr %s537, 8
        %s539 = scalar_lea.vmem [#allocation3], %s538
        // Predicated region
        $region49: #{tpu_custom_call.1} parent=39 // pred_check
          %p540 = pneg %p174
        $region50: #{tpu_custom_call.1} parent=39 // pred_check_branch
          %542 = sbr.rel (%p540) target = $region52
        $region51: #{tpu_custom_call.1} parent=39 // pred_region
          %s544 = ssub.s32 128, 128
          %545 = vsyncadd %s536, %s544
          %s546 = smul.addr %s23, 128
          %s547 = scalar_lea.hbm %s5, %s546
          %s549 = sshll.u32 %s539, 4
          %s550 = int_to_ptr.vmem [resolvable:$true] %s549
          %552 = dma.vmem_to_hbm [thread:$0]  %s550, 128, %s547, %s536
        $region52: #{tpu_custom_call.1} parent=39 // pred_fallthru
          _
      $region40: #{tpu_custom_call.1} parent=5 // pred_fallthru
        _
      %p553 = scmp.le.s32.totalorder 2, %s14
      // Predicated region
      $region53: #{tpu_custom_call.1} parent=5 // pred_check
        %p554 = pneg %p553
      $region54: #{tpu_custom_call.1} parent=5 // pred_check_branch
        %556 = sbr.rel (%p554) target = $region56
      $region55: #{tpu_custom_call.1} parent=5 // pred_region
        %s557 = ssub.s32 %s14, 2
        // Predicated region
        $region57: #{tpu_custom_call.1} parent=55 // pred_check
          %p558 = pneg %p180
        $region58: #{tpu_custom_call.1} parent=55 // pred_check_branch
          %560 = sbr.rel (%p558) target = $region60
        $region59: #{tpu_custom_call.1} parent=55 // pred_region
          %s561 = sand.u32 %s165, 1
          %s562 = scalar_lea.sflag [#allocation4], %s561
          %s563 = sand.u32 %s165, 1
          %s564 = smul.addr %s563, 8
          %s565 = scalar_lea.vmem [#allocation3], %s564
          %566 = dma.done %s562, 128
        $region60: #{tpu_custom_call.1} parent=55 // pred_fallthru
          _
      $region56: #{tpu_custom_call.1} parent=5 // pred_fallthru
        _
    $region6: #{tpu_custom_call.1} parent=1 // loop_footer
      %s18 = sadd.s32 1, %s14
    $region7: #{tpu_custom_call.1} parent=1 // loop_footer_branch
      %13 = sbr.rel target = $region3
    $region8: #{tpu_custom_call.1} parent=1 // loop_exit
      _
    %567 = vsyncpa [#allocation4], 1
    %s568 = scalar_lea.sflag [#allocation4], 1
    %569 = vsyncpa %s568, 1

</llo_original>
